<compile_context>
chip_gen: v5e
topology: v5e:2x2
jax: 0.10.0
libtpu: 0.0.40
codegen_flags: <defaults>
</compile_context>

<pallas_src>
import functools

import jax
import jax.numpy as jnp
from jax.experimental import pallas as pl
from jax.experimental.pallas import tpu as pltpu


def _round_up(x, m):
    return ((x + m - 1) // m) * m


def _linear_kernel(w_ref, b_ref, x_ref, o_ref):
    # w_ref: (in_f,) f32 in SMEM   (scalar reads)
    # b_ref: (1,)    f32 in SMEM
    # x_ref: (in_f, TB) f32 in VMEM — batch on the lane axis
    # o_ref: (1, TB)    f32 in VMEM — lane-dense output
    x = x_ref[...]                                   # (in_f, TB)
    in_f = x.shape[0]                                # static (= 3)
    # Unrolled VPU fused multiply-add over the (tiny) feature dim.
    acc = x[0:1, :] * w_ref[0]
    for k in range(1, in_f):
        acc = acc + x[k:k + 1, :] * w_ref[k]
    acc = acc + b_ref[0]
    o_ref[...] = acc.astype(o_ref.dtype)


@functools.partial(jax.jit, static_argnames=("max_lane_block",))
def linear_regression_forward(x, weight, bias, *, max_lane_block=1024):
    """Equivalent of nn.Linear(3, 1).forward(x).

    x:      (B, 3) float32
    weight: (1, 3) float32   (PyTorch layout: (out_features, in_features))
    bias:   (1,)   float32
    returns (B, 1) float32
    """
    B, in_f = x.shape
    out_f, _ = weight.shape  # = 1

    # --- lane-dense layout: batch on the 128-lane axis -----------------------
    padded_b = _round_up(B, 128)
    tb = min(padded_b, max_lane_block)               # lane block, multiple of 128
    padded_b = _round_up(B, tb)

    x_t = jnp.pad(x.T, ((0, 0), (0, padded_b - B)))  # (in_f, padded_b)
    w_vec = weight.reshape(in_f).astype(jnp.float32)  # (3,)  -> SMEM scalars
    b_vec = bias.reshape(out_f).astype(jnp.float32)   # (1,)  -> SMEM scalar

    grid = (padded_b // tb,)

    y_t = pl.pallas_call(
        _linear_kernel,
        out_shape=jax.ShapeDtypeStruct((out_f, padded_b), x.dtype),
        grid=grid,
        in_specs=[
            pl.BlockSpec(memory_space=pltpu.MemorySpace.SMEM),   # weight scalars
            pl.BlockSpec(memory_space=pltpu.MemorySpace.SMEM),   # bias scalar
            pl.BlockSpec((in_f, tb), lambda i: (0, i)),          # x tile (3, TB)
        ],
        out_specs=pl.BlockSpec((out_f, tb), lambda i: (0, i)),   # y tile (1, TB)
        compiler_params=pltpu.CompilerParams(
            dimension_semantics=("parallel",),
        ),
        cost_estimate=pl.CostEstimate(
            flops=2 * B * in_f + B,
            transcendentals=0,
            bytes_accessed=4 * padded_b * (in_f + out_f) + 4 * (in_f + out_f),
        ),
    )(w_vec, b_vec, x_t)

    # Back to PyTorch layout: (B, 1).
    return y_t[:, :B].T


# TODO(synk): at B=8 the whole call is launch/DMA-overhead-bound (~48 FLOPs);
# in a real model this linear should be fused into the surrounding Pallas
# kernel rather than invoked standalone.

if __name__ == "__main__":
    key = jax.random.PRNGKey(0)
    kx, kw, kb = jax.random.split(key, 3)

    # Small shapes consistent with the module: batch=8, in_features=3.
    B, IN_F, OUT_F = 8, 3, 1
    x = jax.random.normal(kx, (B, IN_F), dtype=jnp.float32)

    # Deterministic parameter init (mimics nn.Linear's uniform(-1/sqrt(in), 1/sqrt(in))).
    bound = 1.0 / jnp.sqrt(jnp.float32(IN_F))
    weight = jax.random.uniform(kw, (OUT_F, IN_F), minval=-bound, maxval=bound,
                                dtype=jnp.float32)
    bias = jax.random.uniform(kb, (OUT_F,), minval=-bound, maxval=bound,
                              dtype=jnp.float32)

    y = linear_regression_forward(x, weight, bias)
    jax.block_until_ready(y)

    # Sanity check against plain JAX reference.
    y_ref = x @ weight.T + bias
    assert y.shape == (B, OUT_F), y.shape
    assert jnp.allclose(y, y_ref, atol=1e-5, rtol=1e-5)

    print("KERNEL_OK")
</pallas_src>

<mosaic_0001>
module attributes {stable_mosaic.version = 11 : i64} {
  func.func @_linear_kernel(%arg0: i32, %arg1: memref<3xf32, #tpu.memory_space<smem>>, %arg2: memref<1xf32, #tpu.memory_space<smem>>, %arg3: memref<3x128xf32, #tpu.memory_space<vmem>>, %arg4: memref<1x128xf32, #tpu.memory_space<vmem>>) attributes {dimension_semantics = [#tpu.dimension_semantics<parallel>], iteration_bounds = array<i64: 1>, scalar_prefetch = 0 : i64, scratch_operands = 0 : i64, tpu.core_type = #tpu.core_type<tc>, window_params = [{transform_indices = @transform_0, window_bounds = array<i64: 3>}, {transform_indices = @transform_1, window_bounds = array<i64: 1>}, {transform_indices = @transform_2, window_bounds = array<i64: 3, 128>}, {transform_indices = @transform_3, window_bounds = array<i64: 1, 128>}]} {
    %c0 = arith.constant 0 : index
    %c0_0 = arith.constant 0 : index
    %0 = vector.load %arg3[%c0, %c0_0] : memref<3x128xf32, #tpu.memory_space<vmem>>, vector<3x128xf32>
    %1 = vector.extract_strided_slice %0 {offsets = [0, 0], sizes = [1, 128], strides = [1, 1]} : vector<3x128xf32> to vector<1x128xf32>
    %c0_1 = arith.constant 0 : index
    %2 = memref.load %arg1[%c0_1] : memref<3xf32, #tpu.memory_space<smem>>
    %3 = vector.broadcast %2 : f32 to vector<1x128xf32>
    %4 = arith.mulf %1, %3 : vector<1x128xf32>
    %5 = vector.extract_strided_slice %0 {offsets = [1, 0], sizes = [1, 128], strides = [1, 1]} : vector<3x128xf32> to vector<1x128xf32>
    %c1 = arith.constant 1 : index
    %6 = memref.load %arg1[%c1] : memref<3xf32, #tpu.memory_space<smem>>
    %7 = vector.broadcast %6 : f32 to vector<1x128xf32>
    %8 = arith.mulf %5, %7 : vector<1x128xf32>
    %9 = arith.addf %4, %8 : vector<1x128xf32>
    %10 = vector.extract_strided_slice %0 {offsets = [2, 0], sizes = [1, 128], strides = [1, 1]} : vector<3x128xf32> to vector<1x128xf32>
    %c2 = arith.constant 2 : index
    %11 = memref.load %arg1[%c2] : memref<3xf32, #tpu.memory_space<smem>>
    %12 = vector.broadcast %11 : f32 to vector<1x128xf32>
    %13 = arith.mulf %10, %12 : vector<1x128xf32>
    %14 = arith.addf %9, %13 : vector<1x128xf32>
    %c0_2 = arith.constant 0 : index
    %15 = memref.load %arg2[%c0_2] : memref<1xf32, #tpu.memory_space<smem>>
    %16 = vector.broadcast %15 : f32 to vector<1x128xf32>
    %17 = arith.addf %14, %16 : vector<1x128xf32>
    %c0_3 = arith.constant 0 : index
    %c0_4 = arith.constant 0 : index
    %18 = vector.load %arg4[%c0_3, %c0_4] : memref<1x128xf32, #tpu.memory_space<vmem>>, vector<1x128xf32>
    tpu.vector_store %arg4[%c0_3, %c0_4], %17 {strides = array<i32>} : memref<1x128xf32, #tpu.memory_space<vmem>>, vector<1x128xf32>,
    return
  }
  func.func @transform_0(%arg0: i32) -> i32 {
    %c0_i32 = arith.constant 0 : i32
    %c0_i32_0 = arith.constant 0 : i32
    return %c0_i32 : i32
  }
  func.func @transform_1(%arg0: i32) -> i32 {
    %c0_i32 = arith.constant 0 : i32
    %c0_i32_0 = arith.constant 0 : i32
    return %c0_i32 : i32
  }
  func.func @transform_2(%arg0: i32) -> (i32, i32) {
    %c0_i32 = arith.constant 0 : i32
    %c0_i32_0 = arith.constant 0 : i32
    return %c0_i32, %arg0 : i32, i32
  }
  func.func @transform_3(%arg0: i32) -> (i32, i32) {
    %c0_i32 = arith.constant 0 : i32
    %c0_i32_0 = arith.constant 0 : i32
    return %c0_i32, %arg0 : i32, i32
  }
}

</mosaic_0001>

<llo_original>
// kernel: linear_regression_forward.1
$region0: #{linear_regression_forward.1}
  #allocation0 [shape = 'u32[]', space=smem, size = 0x4, offset = 0x4, fixed_abs, tag = 'smem constant byte address 0x4 - core index']
  #allocation1 [shape = 'u32[72,128]{1,0:T(1,128)}', space=vmem, size = 0x9000, scoped, tag = 'internal scratch']
  #allocation2 [shape = 'f32[1]{0:T(128)S(6)}', space=smem, size = 0x200, scoped, tag = 'scoped memory for linear_regression_forward.1']
  %s0 = inlined_call_operand.vmem [shape: f32[3], index: 0, kind: input, shape index: {}]
  %s1 = inlined_call_operand.<no memory space> [shape: f32[1], index: 1, kind: input, shape index: {}]
  %s2 = inlined_call_operand.vmem [shape: f32[3,128], index: 2, kind: input, shape index: {}]
  %s3 = inlined_call_operand.vmem [shape: f32[1,128], index: 3, kind: output, shape index: {}]
  %s4 = sld [smem:[#allocation0]]
  $region26: #{linear_regression_forward.1} parent=0
    _
  %s6 = ssub.s32 1, %s4
  %s7 = scalar_select 0, %s6, %s4
  %8 = sst [smem:[#allocation2]] %s1
  $region1: #{linear_regression_forward.1} parent=0
    #allocation3 [shape = 'u8[512]{0}', space=smem, size = 0x200, scoped, tag = 'input window, operand 0, single buffered']
    #allocation4 [shape = 's32[1]{0}', space=sflag, size = 0x4, scoped, tag = 'scoped memory for linear_regression_forward.1']
    %9 = vsyncpa [#allocation4], 0
    // Predicated region
    $region2: #{linear_regression_forward.1} parent=1 // pred_check
      _
    $region3: #{linear_regression_forward.1} parent=1 // pred_check_branch
      %11 = sbr.rel (0) target = $region5
    $region4: #{linear_regression_forward.1} parent=1 // pred_region
      %13 = vsyncadd [#allocation4], 0
      %s15 = sshll.u32 %s0, 4
      %s16 = int_to_ptr.vmem [resolvable:$true] %s15
      %18 = dma.vmem_to_smem %s16, 16, [#allocation3], [#allocation4]
    $region5: #{linear_regression_forward.1} parent=1 // pred_fallthru
      _
    // Predicated region
    $region6: #{linear_regression_forward.1} parent=1 // pred_check
      _
    $region7: #{linear_regression_forward.1} parent=1 // pred_check_branch
      %20 = sbr.rel (0) target = $region9
    $region8: #{linear_regression_forward.1} parent=1 // pred_region
      _
    $region9: #{linear_regression_forward.1} parent=1 // pred_fallthru
      _
    // Predicated region
    $region10: #{linear_regression_forward.1} parent=1 // pred_check
      _
    $region11: #{linear_regression_forward.1} parent=1 // pred_check_branch
      %22 = sbr.rel (0) target = $region13
    $region12: #{linear_regression_forward.1} parent=1 // pred_region
      _
    $region13: #{linear_regression_forward.1} parent=1 // pred_fallthru
      _
    // Predicated region
    $region14: #{linear_regression_forward.1} parent=1 // pred_check
      _
    $region15: #{linear_regression_forward.1} parent=1 // pred_check_branch
      %24 = sbr.rel (0) target = $region17
    $region16: #{linear_regression_forward.1} parent=1 // pred_region
      %26 = dma.done [#allocation4], 16
    $region17: #{linear_regression_forward.1} parent=1 // pred_fallthru
      _
    %27 = sfence
    %v28 = vld [vmem:[%s2] sm:$0x7]
    %s29 = sld [smem:[#allocation3]]
    %v30 = vstv %s29
    %v31 = vmul.f32 %v28, %v30
    %s32 = sld [smem:[#allocation3 + $0x1]]
    %v33 = vstv %s32
    %v34 = vmul.f32 %v28, %v33
    %v36 = vrot.slane %v34, 1
    %v38 = vadd.f32 %v31, %v36
    %s39 = sld [smem:[#allocation3 + $0x2]]
    %v40 = vstv %s39
    %v41 = vmul.f32 %v28, %v40
    %v43 = vrot.slane %v41, 2
    %v45 = vadd.f32 %v38, %v43
    %s46 = sld [smem:[#allocation2]]
    %v47 = vstv %s46
    %v48 = vadd.f32 %v45, %v47
    %49 = vst [vmem:[%s3] sm:$0x1] %v48
    // Predicated region
    $region18: #{linear_regression_forward.1} parent=1 // pred_check
      _
    $region19: #{linear_regression_forward.1} parent=1 // pred_check_branch
      %51 = sbr.rel (0) target = $region21
    $region20: #{linear_regression_forward.1} parent=1 // pred_region
      _
    $region21: #{linear_regression_forward.1} parent=1 // pred_fallthru
      _
    // Predicated region
    $region22: #{linear_regression_forward.1} parent=1 // pred_check
      _
    $region23: #{linear_regression_forward.1} parent=1 // pred_check_branch
      %53 = sbr.rel (0) target = $region25
    $region24: #{linear_regression_forward.1} parent=1 // pred_region
      _
    $region25: #{linear_regression_forward.1} parent=1 // pred_fallthru
      _
    %54 = vsyncpa [#allocation4], 1

</llo_original>
